<compile_context>
chip_gen: v7x
topology: tpu7x:2x2x1
jax: 0.10.0
libtpu: 0.0.40
codegen_flags: <defaults>
</compile_context>

<pallas_src>
import functools

import jax
import jax.numpy as jnp
from jax.experimental import pallas as pl
from jax.experimental.pallas import tpu as pltpu


LANE = 128


def _round_up(x, m):
    return (x + m - 1) // m * m


# ----------------------------------------------------------------------------
# Fused kernel: synthetic backbone (1x1 conv + ReLU + GAP) -> projection head.
# Whole (padded) problem in one block; BN needs full-batch statistics anyway.
# ----------------------------------------------------------------------------
def vicreg_fused_kernel(x_ref, wc_ref, bc_ref,
                        w1_ref, g1_ref, b1_ref,
                        w2_ref, g2_ref, b2_ref,
                        w3_ref, b3_ref,
                        z_ref, *, batch, spatial):
    eps = 1e-5

    # --- synthetic backbone: 1x1 conv as one batched matmul, ReLU, GAP -------
    # x_ref: (B*S, Cin), wc_ref: (Cin, Cbp), bc_ref: (1, Cbp)
    y = jnp.dot(x_ref[...], wc_ref[...], preferred_element_type=jnp.float32)
    y = jnp.maximum(y + bc_ref[...], 0.0)                       # (B*S, Cbp)

    # Global average pool over the spatial axis. B is tiny here, so a static
    # per-sample slice keeps everything 2D; at real batch sizes use a batch
    # grid axis instead (also feeds v7x's second TensorCore).
    feat = jnp.concatenate(
        [jnp.mean(y[b * spatial:(b + 1) * spatial, :], axis=0, keepdims=True)
         for b in range(batch)],
        axis=0)                                                 # (B, Cbp)

    # --- projection head ------------------------------------------------------
    def bn_relu(h, g, b):
        mu = jnp.mean(h, axis=0, keepdims=True)
        var = jnp.mean((h - mu) * (h - mu), axis=0, keepdims=True)   # biased
        return jnp.maximum(g * (h - mu) * jax.lax.rsqrt(var + eps) + b, 0.0)

    # Layer 1: Linear(bias=False) -> BN -> ReLU
    h1 = jnp.dot(feat, w1_ref[...], preferred_element_type=jnp.float32)
    h1 = bn_relu(h1, g1_ref[...], b1_ref[...])

    # Layer 2: Linear(bias=False) -> BN -> ReLU
    h2 = jnp.dot(h1, w2_ref[...], preferred_element_type=jnp.float32)
    h2 = bn_relu(h2, g2_ref[...], b2_ref[...])

    # Layer 3: Linear(bias=True)
    z_ref[...] = (jnp.dot(h2, w3_ref[...], preferred_element_type=jnp.float32)
                  + b3_ref[...])


# ----------------------------------------------------------------------------
# Wrapper
# ----------------------------------------------------------------------------
def vicreg_forward(x_nchw, params):
    B, Cin, H, W = x_nchw.shape
    S = H * W

    wc, bc = params["wc"], params["bc"]
    w1, g1, b1 = params["w1"], params["g1"], params["b1"]
    w2, g2, b2 = params["w2"], params["g2"], params["b2"]
    w3, b3 = params["w3"], params["b3"]

    Cb = wc.shape[1]
    Hd = w1.shape[1]
    Dout = w3.shape[1]
    Cbp = _round_up(Cb, LANE)
    Hdp = _round_up(Hd, LANE)
    Dp = _round_up(Dout, LANE)

    # Layout: NCHW -> (B*S, Cin); the 1x1 conv becomes a single matmul.
    x2 = jnp.transpose(x_nchw, (0, 2, 3, 1)).reshape(B * S, Cin)
    x2 = x2.astype(jnp.float32)

    # Zero-pad feature axes to multiples of 128 -> lane-dense tensors/stores.
    pad_c = lambda a, c: jnp.pad(a, ((0, 0), (0, c - a.shape[1])))
    pad_rc = lambda a, r, c: jnp.pad(a, ((0, r - a.shape[0]),
                                         (0, c - a.shape[1])))

    wc_p = pad_c(wc, Cbp)
    bc_p = pad_c(bc, Cbp)
    w1_p = pad_rc(w1, Cbp, Hdp)
    g1_p = pad_c(g1, Hdp)
    b1_p = pad_c(b1, Hdp)
    w2_p = pad_rc(w2, Hdp, Hdp)
    g2_p = pad_c(g2, Hdp)
    b2_p = pad_c(b2, Hdp)
    w3_p = pad_rc(w3, Hdp, Dp)
    b3_p = pad_c(b3, Dp)

    flops = 2 * (B * S * Cin * Cbp + B * Cbp * Hdp + B * Hdp * Hdp + B * Hdp * Dp)
    bytes_accessed = 4 * (x2.size + wc_p.size + bc_p.size
                          + w1_p.size + g1_p.size + b1_p.size
                          + w2_p.size + g2_p.size + b2_p.size
                          + w3_p.size + b3_p.size + B * Dp)

    kernel = functools.partial(vicreg_fused_kernel, batch=B, spatial=S)

    def full(shape):
        return pl.BlockSpec(shape, lambda i, _n=len(shape): (0,) * _n)

    z_pad = pl.pallas_call(
        kernel,
        out_shape=jax.ShapeDtypeStruct((B, Dp), jnp.float32),
        grid=(1,),
        in_specs=[
            full((B * S, Cin)),
            full((Cin, Cbp)), full((1, Cbp)),
            full((Cbp, Hdp)), full((1, Hdp)), full((1, Hdp)),
            full((Hdp, Hdp)), full((1, Hdp)), full((1, Hdp)),
            full((Hdp, Dp)), full((1, Dp)),
        ],
        out_specs=full((B, Dp)),
        compiler_params=pltpu.CompilerParams(
            dimension_semantics=("arbitrary",)),
        cost_estimate=pl.CostEstimate(
            flops=flops,
            transcendentals=2 * Hdp,
            bytes_accessed=bytes_accessed),
    )(x2, wc_p, bc_p, w1_p, g1_p, b1_p, w2_p, g2_p, b2_p, w3_p, b3_p)

    return z_pad[:, :Dout]


def init_params(key, cin, backbone_dim, hidden_dim, output_dim):
    ks = jax.random.split(key, 5)
    scale = 0.05
    return {
        # synthetic backbone (1x1 conv)
        "wc": scale * jax.random.normal(ks[0], (cin, backbone_dim), jnp.float32),
        "bc": jnp.zeros((1, backbone_dim), jnp.float32),
        # projection head layer 1 (Linear bias=False + BN)
        "w1": scale * jax.random.normal(ks[1], (backbone_dim, hidden_dim), jnp.float32),
        "g1": jnp.ones((1, hidden_dim), jnp.float32),
        "b1": jnp.zeros((1, hidden_dim), jnp.float32),
        # projection head layer 2 (Linear bias=False + BN)
        "w2": scale * jax.random.normal(ks[2], (hidden_dim, hidden_dim), jnp.float32),
        "g2": jnp.ones((1, hidden_dim), jnp.float32),
        "b2": jnp.zeros((1, hidden_dim), jnp.float32),
        # projection head layer 3 (Linear bias=True, no BN)
        "w3": scale * jax.random.normal(ks[3], (hidden_dim, output_dim), jnp.float32),
        "b3": jnp.zeros((1, output_dim), jnp.float32),
    }


if __name__ == "__main__":
    # Small, forward-consistent shapes.
    B, Cin, H, W = 2, 4, 16, 16
    proj_input_dim = 32      # backbone output dim
    proj_hidden_dim = 64
    proj_output_dim = 32

    key = jax.random.PRNGKey(0)
    kx, kp = jax.random.split(key)
    x = jax.random.normal(kx, (B, Cin, H, W), jnp.float32)
    params = init_params(kp, Cin, proj_input_dim, proj_hidden_dim, proj_output_dim)

    # TODO(synk): the real backbone is a user-supplied nn.Module (e.g. ResNet);
    # a synthetic 1x1-conv+ReLU+GAP backbone with the same output dim is used here.
    z = jax.jit(vicreg_forward)(x, params)
    jax.block_until_ready(z)
    assert z.shape == (B, proj_output_dim)
    print("KERNEL_OK")
</pallas_src>

<mosaic_0001>
module attributes {stable_mosaic.version = 11 : i64} {
  func.func @vicreg_fused_kernel(%arg0: i32, %arg1: memref<512x4xf32, #tpu.memory_space<vmem>>, %arg2: memref<4x128xf32, #tpu.memory_space<vmem>>, %arg3: memref<1x128xf32, #tpu.memory_space<vmem>>, %arg4: memref<128x128xf32, #tpu.memory_space<vmem>>, %arg5: memref<1x128xf32, #tpu.memory_space<vmem>>, %arg6: memref<1x128xf32, #tpu.memory_space<vmem>>, %arg7: memref<128x128xf32, #tpu.memory_space<vmem>>, %arg8: memref<1x128xf32, #tpu.memory_space<vmem>>, %arg9: memref<1x128xf32, #tpu.memory_space<vmem>>, %arg10: memref<128x128xf32, #tpu.memory_space<vmem>>, %arg11: memref<1x128xf32, #tpu.memory_space<vmem>>, %arg12: memref<2x128xf32, #tpu.memory_space<vmem>>) attributes {dimension_semantics = [#tpu.dimension_semantics<arbitrary>], iteration_bounds = array<i64: 1>, scalar_prefetch = 0 : i64, scratch_operands = 0 : i64, tpu.core_type = #tpu.core_type<tc>, window_params = [{pipeline_mode = #tpu.pipeline_mode<synchronous>, transform_indices = @transform_0, window_bounds = array<i64: 512, 4>}, {pipeline_mode = #tpu.pipeline_mode<synchronous>, transform_indices = @transform_1, window_bounds = array<i64: 4, 128>}, {pipeline_mode = #tpu.pipeline_mode<synchronous>, transform_indices = @transform_2, window_bounds = array<i64: 1, 128>}, {pipeline_mode = #tpu.pipeline_mode<synchronous>, transform_indices = @transform_3, window_bounds = array<i64: 128, 128>}, {pipeline_mode = #tpu.pipeline_mode<synchronous>, transform_indices = @transform_4, window_bounds = array<i64: 1, 128>}, {pipeline_mode = #tpu.pipeline_mode<synchronous>, transform_indices = @transform_5, window_bounds = array<i64: 1, 128>}, {pipeline_mode = #tpu.pipeline_mode<synchronous>, transform_indices = @transform_6, window_bounds = array<i64: 128, 128>}, {pipeline_mode = #tpu.pipeline_mode<synchronous>, transform_indices = @transform_7, window_bounds = array<i64: 1, 128>}, {pipeline_mode = #tpu.pipeline_mode<synchronous>, transform_indices = @transform_8, window_bounds = array<i64: 1, 128>}, {pipeline_mode = #tpu.pipeline_mode<synchronous>, transform_indices = @transform_9, window_bounds = array<i64: 128, 128>}, {pipeline_mode = #tpu.pipeline_mode<synchronous>, transform_indices = @transform_10, window_bounds = array<i64: 1, 128>}, {pipeline_mode = #tpu.pipeline_mode<synchronous>, transform_indices = @transform_11, window_bounds = array<i64: 2, 128>}]} {
    %c0 = arith.constant 0 : index
    %c0_0 = arith.constant 0 : index
    %0 = vector.load %arg1[%c0, %c0_0] : memref<512x4xf32, #tpu.memory_space<vmem>>, vector<512x4xf32>
    %c0_1 = arith.constant 0 : index
    %c0_2 = arith.constant 0 : index
    %1 = vector.load %arg2[%c0_1, %c0_2] : memref<4x128xf32, #tpu.memory_space<vmem>>, vector<4x128xf32>
    %cst = arith.constant dense<0.000000e+00> : vector<512x128xf32>
    %2 = tpu.matmul %0, %1, %cst {dimension_numbers = #tpu.dot_dimension_numbers<[1], [0], [0], [1], [0, 0, 1, 1], [], []>} : vector<512x4xf32>, vector<4x128xf32>, vector<512x128xf32> -> vector<512x128xf32>
    %c0_3 = arith.constant 0 : index
    %c0_4 = arith.constant 0 : index
    %3 = vector.load %arg3[%c0_3, %c0_4] : memref<1x128xf32, #tpu.memory_space<vmem>>, vector<1x128xf32>
    %4 = vector.broadcast %3 : vector<1x128xf32> to vector<512x128xf32>
    %5 = arith.addf %2, %4 : vector<512x128xf32>
    %cst_5 = arith.constant 0.000000e+00 : f32
    %6 = vector.broadcast %cst_5 : f32 to vector<512x128xf32>
    %7 = arith.maximumf %5, %6 : vector<512x128xf32>
    %8 = vector.extract_strided_slice %7 {offsets = [0, 0], sizes = [256, 128], strides = [1, 1]} : vector<512x128xf32> to vector<256x128xf32>
    %cst_6 = arith.constant dense<0.000000e+00> : vector<128xf32>
    %9 = vector.multi_reduction <add>, %8, %cst_6 [0] : vector<256x128xf32> to vector<128xf32>
    %10 = vector.shape_cast %9 : vector<128xf32> to vector<1x128xf32>
    %cst_7 = arith.constant 2.560000e+02 : f32
    %11 = vector.broadcast %cst_7 : f32 to vector<1x128xf32>
    %12 = arith.divf %10, %11 : vector<1x128xf32>
    %13 = vector.extract_strided_slice %7 {offsets = [256, 0], sizes = [256, 128], strides = [1, 1]} : vector<512x128xf32> to vector<256x128xf32>
    %cst_8 = arith.constant dense<0.000000e+00> : vector<128xf32>
    %14 = vector.multi_reduction <add>, %13, %cst_8 [0] : vector<256x128xf32> to vector<128xf32>
    %15 = vector.shape_cast %14 : vector<128xf32> to vector<1x128xf32>
    %cst_9 = arith.constant 2.560000e+02 : f32
    %16 = vector.broadcast %cst_9 : f32 to vector<1x128xf32>
    %17 = arith.divf %15, %16 : vector<1x128xf32>
    %18 = tpu.concatenate %12, %17 in 0 : vector<1x128xf32>, vector<1x128xf32> -> vector<2x128xf32>
    %c0_10 = arith.constant 0 : index
    %c0_11 = arith.constant 0 : index
    %19 = vector.load %arg4[%c0_10, %c0_11] : memref<128x128xf32, #tpu.memory_space<vmem>>, vector<128x128xf32>
    %cst_12 = arith.constant dense<0.000000e+00> : vector<2x128xf32>
    %20 = tpu.matmul %18, %19, %cst_12 {dimension_numbers = #tpu.dot_dimension_numbers<[1], [0], [0], [1], [0, 0, 1, 1], [], []>} : vector<2x128xf32>, vector<128x128xf32>, vector<2x128xf32> -> vector<2x128xf32>
    %c0_13 = arith.constant 0 : index
    %c0_14 = arith.constant 0 : index
    %21 = vector.load %arg5[%c0_13, %c0_14] : memref<1x128xf32, #tpu.memory_space<vmem>>, vector<1x128xf32>
    %c0_15 = arith.constant 0 : index
    %c0_16 = arith.constant 0 : index
    %22 = vector.load %arg6[%c0_15, %c0_16] : memref<1x128xf32, #tpu.memory_space<vmem>>, vector<1x128xf32>
    %cst_17 = arith.constant dense<0.000000e+00> : vector<128xf32>
    %23 = vector.multi_reduction <add>, %20, %cst_17 [0] : vector<2x128xf32> to vector<128xf32>
    %24 = vector.shape_cast %23 : vector<128xf32> to vector<1x128xf32>
    %cst_18 = arith.constant 2.000000e+00 : f32
    %25 = vector.broadcast %cst_18 : f32 to vector<1x128xf32>
    %26 = arith.divf %24, %25 : vector<1x128xf32>
    %27 = vector.broadcast %26 : vector<1x128xf32> to vector<2x128xf32>
    %28 = arith.subf %20, %27 : vector<2x128xf32>
    %29 = vector.broadcast %26 : vector<1x128xf32> to vector<2x128xf32>
    %30 = arith.subf %20, %29 : vector<2x128xf32>
    %31 = arith.mulf %28, %30 : vector<2x128xf32>
    %cst_19 = arith.constant dense<0.000000e+00> : vector<128xf32>
    %32 = vector.multi_reduction <add>, %31, %cst_19 [0] : vector<2x128xf32> to vector<128xf32>
    %33 = vector.shape_cast %32 : vector<128xf32> to vector<1x128xf32>
    %cst_20 = arith.constant 2.000000e+00 : f32
    %34 = vector.broadcast %cst_20 : f32 to vector<1x128xf32>
    %35 = arith.divf %33, %34 : vector<1x128xf32>
    %36 = vector.broadcast %26 : vector<1x128xf32> to vector<2x128xf32>
    %37 = arith.subf %20, %36 : vector<2x128xf32>
    %38 = vector.broadcast %21 : vector<1x128xf32> to vector<2x128xf32>
    %39 = arith.mulf %38, %37 : vector<2x128xf32>
    %cst_21 = arith.constant 9.99999974E-6 : f32
    %40 = vector.broadcast %cst_21 : f32 to vector<1x128xf32>
    %41 = arith.addf %35, %40 : vector<1x128xf32>
    %42 = math.rsqrt %41 : vector<1x128xf32>
    %43 = vector.broadcast %42 : vector<1x128xf32> to vector<2x128xf32>
    %44 = arith.mulf %39, %43 : vector<2x128xf32>
    %45 = vector.broadcast %22 : vector<1x128xf32> to vector<2x128xf32>
    %46 = arith.addf %44, %45 : vector<2x128xf32>
    %cst_22 = arith.constant 0.000000e+00 : f32
    %47 = vector.broadcast %cst_22 : f32 to vector<2x128xf32>
    %48 = arith.maximumf %46, %47 : vector<2x128xf32>
    %c0_23 = arith.constant 0 : index
    %c0_24 = arith.constant 0 : index
    %49 = vector.load %arg7[%c0_23, %c0_24] : memref<128x128xf32, #tpu.memory_space<vmem>>, vector<128x128xf32>
    %cst_25 = arith.constant dense<0.000000e+00> : vector<2x128xf32>
    %50 = tpu.matmul %48, %49, %cst_25 {dimension_numbers = #tpu.dot_dimension_numbers<[1], [0], [0], [1], [0, 0, 1, 1], [], []>} : vector<2x128xf32>, vector<128x128xf32>, vector<2x128xf32> -> vector<2x128xf32>
    %c0_26 = arith.constant 0 : index
    %c0_27 = arith.constant 0 : index
    %51 = vector.load %arg8[%c0_26, %c0_27] : memref<1x128xf32, #tpu.memory_space<vmem>>, vector<1x128xf32>
    %c0_28 = arith.constant 0 : index
    %c0_29 = arith.constant 0 : index
    %52 = vector.load %arg9[%c0_28, %c0_29] : memref<1x128xf32, #tpu.memory_space<vmem>>, vector<1x128xf32>
    %cst_30 = arith.constant dense<0.000000e+00> : vector<128xf32>
    %53 = vector.multi_reduction <add>, %50, %cst_30 [0] : vector<2x128xf32> to vector<128xf32>
    %54 = vector.shape_cast %53 : vector<128xf32> to vector<1x128xf32>
    %cst_31 = arith.constant 2.000000e+00 : f32
    %55 = vector.broadcast %cst_31 : f32 to vector<1x128xf32>
    %56 = arith.divf %54, %55 : vector<1x128xf32>
    %57 = vector.broadcast %56 : vector<1x128xf32> to vector<2x128xf32>
    %58 = arith.subf %50, %57 : vector<2x128xf32>
    %59 = vector.broadcast %56 : vector<1x128xf32> to vector<2x128xf32>
    %60 = arith.subf %50, %59 : vector<2x128xf32>
    %61 = arith.mulf %58, %60 : vector<2x128xf32>
    %cst_32 = arith.constant dense<0.000000e+00> : vector<128xf32>
    %62 = vector.multi_reduction <add>, %61, %cst_32 [0] : vector<2x128xf32> to vector<128xf32>
    %63 = vector.shape_cast %62 : vector<128xf32> to vector<1x128xf32>
    %cst_33 = arith.constant 2.000000e+00 : f32
    %64 = vector.broadcast %cst_33 : f32 to vector<1x128xf32>
    %65 = arith.divf %63, %64 : vector<1x128xf32>
    %66 = vector.broadcast %56 : vector<1x128xf32> to vector<2x128xf32>
    %67 = arith.subf %50, %66 : vector<2x128xf32>
    %68 = vector.broadcast %51 : vector<1x128xf32> to vector<2x128xf32>
    %69 = arith.mulf %68, %67 : vector<2x128xf32>
    %cst_34 = arith.constant 9.99999974E-6 : f32
    %70 = vector.broadcast %cst_34 : f32 to vector<1x128xf32>
    %71 = arith.addf %65, %70 : vector<1x128xf32>
    %72 = math.rsqrt %71 : vector<1x128xf32>
    %73 = vector.broadcast %72 : vector<1x128xf32> to vector<2x128xf32>
    %74 = arith.mulf %69, %73 : vector<2x128xf32>
    %75 = vector.broadcast %52 : vector<1x128xf32> to vector<2x128xf32>
    %76 = arith.addf %74, %75 : vector<2x128xf32>
    %cst_35 = arith.constant 0.000000e+00 : f32
    %77 = vector.broadcast %cst_35 : f32 to vector<2x128xf32>
    %78 = arith.maximumf %76, %77 : vector<2x128xf32>
    %c0_36 = arith.constant 0 : index
    %c0_37 = arith.constant 0 : index
    %79 = vector.load %arg10[%c0_36, %c0_37] : memref<128x128xf32, #tpu.memory_space<vmem>>, vector<128x128xf32>
    %cst_38 = arith.constant dense<0.000000e+00> : vector<2x128xf32>
    %80 = tpu.matmul %78, %79, %cst_38 {dimension_numbers = #tpu.dot_dimension_numbers<[1], [0], [0], [1], [0, 0, 1, 1], [], []>} : vector<2x128xf32>, vector<128x128xf32>, vector<2x128xf32> -> vector<2x128xf32>
    %c0_39 = arith.constant 0 : index
    %c0_40 = arith.constant 0 : index
    %81 = vector.load %arg11[%c0_39, %c0_40] : memref<1x128xf32, #tpu.memory_space<vmem>>, vector<1x128xf32>
    %82 = vector.broadcast %81 : vector<1x128xf32> to vector<2x128xf32>
    %83 = arith.addf %80, %82 : vector<2x128xf32>
    %c0_41 = arith.constant 0 : index
    %c0_42 = arith.constant 0 : index
    %84 = vector.load %arg12[%c0_41, %c0_42] : memref<2x128xf32, #tpu.memory_space<vmem>>, vector<2x128xf32>
    tpu.vector_store %arg12[%c0_41, %c0_42], %83 {strides = array<i32>} : memref<2x128xf32, #tpu.memory_space<vmem>>, vector<2x128xf32>,
    return
  }
  func.func @transform_0(%arg0: i32) -> (i32, i32) {
    %c0_i32 = arith.constant 0 : i32
    %c0_i32_0 = arith.constant 0 : i32
    %c0_i32_1 = arith.constant 0 : i32
    return %c0_i32, %c0_i32_0 : i32, i32
  }
  func.func @transform_1(%arg0: i32) -> (i32, i32) {
    %c0_i32 = arith.constant 0 : i32
    %c0_i32_0 = arith.constant 0 : i32
    %c0_i32_1 = arith.constant 0 : i32
    return %c0_i32, %c0_i32_0 : i32, i32
  }
  func.func @transform_2(%arg0: i32) -> (i32, i32) {
    %c0_i32 = arith.constant 0 : i32
    %c0_i32_0 = arith.constant 0 : i32
    %c0_i32_1 = arith.constant 0 : i32
    return %c0_i32, %c0_i32_0 : i32, i32
  }
  func.func @transform_3(%arg0: i32) -> (i32, i32) {
    %c0_i32 = arith.constant 0 : i32
    %c0_i32_0 = arith.constant 0 : i32
    %c0_i32_1 = arith.constant 0 : i32
    return %c0_i32, %c0_i32_0 : i32, i32
  }
  func.func @transform_4(%arg0: i32) -> (i32, i32) {
    %c0_i32 = arith.constant 0 : i32
    %c0_i32_0 = arith.constant 0 : i32
    %c0_i32_1 = arith.constant 0 : i32
    return %c0_i32, %c0_i32_0 : i32, i32
  }
  func.func @transform_5(%arg0: i32) -> (i32, i32) {
    %c0_i32 = arith.constant 0 : i32
    %c0_i32_0 = arith.constant 0 : i32
    %c0_i32_1 = arith.constant 0 : i32
    return %c0_i32, %c0_i32_0 : i32, i32
  }
  func.func @transform_6(%arg0: i32) -> (i32, i32) {
    %c0_i32 = arith.constant 0 : i32
    %c0_i32_0 = arith.constant 0 : i32
    %c0_i32_1 = arith.constant 0 : i32
    return %c0_i32, %c0_i32_0 : i32, i32
  }
  func.func @transform_7(%arg0: i32) -> (i32, i32) {
    %c0_i32 = arith.constant 0 : i32
    %c0_i32_0 = arith.constant 0 : i32
    %c0_i32_1 = arith.constant 0 : i32
    return %c0_i32, %c0_i32_0 : i32, i32
  }
  func.func @transform_8(%arg0: i32) -> (i32, i32) {
    %c0_i32 = arith.constant 0 : i32
    %c0_i32_0 = arith.constant 0 : i32
    %c0_i32_1 = arith.constant 0 : i32
    return %c0_i32, %c0_i32_0 : i32, i32
  }
  func.func @transform_9(%arg0: i32) -> (i32, i32) {
    %c0_i32 = arith.constant 0 : i32
    %c0_i32_0 = arith.constant 0 : i32
    %c0_i32_1 = arith.constant 0 : i32
    return %c0_i32, %c0_i32_0 : i32, i32
  }
  func.func @transform_10(%arg0: i32) -> (i32, i32) {
    %c0_i32 = arith.constant 0 : i32
    %c0_i32_0 = arith.constant 0 : i32
    %c0_i32_1 = arith.constant 0 : i32
    return %c0_i32, %c0_i32_0 : i32, i32
  }
  func.func @transform_11(%arg0: i32) -> (i32, i32) {
    %c0_i32 = arith.constant 0 : i32
    %c0_i32_0 = arith.constant 0 : i32
    %c0_i32_1 = arith.constant 0 : i32
    return %c0_i32, %c0_i32_0 : i32, i32
  }
}

</mosaic_0001>

<llo_original>
// kernel: vicreg_forward.1
$region0: #{vicreg_forward.1}
  #allocation0 [shape = 'u32[]', space=smem, size = 0x4, offset = 0x4, fixed_abs, tag = 'smem constant byte address 0x4 - core index']
  #allocation1 [shape = 'u32[144,128]{1,0:T(1,128)}', space=vmem, size = 0x12000, scoped, tag = 'internal scratch']
  %s0 = inlined_call_operand.vmem [shape: f32[512,4], index: 0, kind: input, shape index: {}]
  %s1 = inlined_call_operand.vmem [shape: f32[4,128], index: 1, kind: input, shape index: {}]
  %s2 = inlined_call_operand.vmem [shape: f32[1,128], index: 2, kind: input, shape index: {}]
  %s3 = inlined_call_operand.vmem [shape: f32[128,128], index: 3, kind: input, shape index: {}]
  %s4 = inlined_call_operand.vmem [shape: f32[1,128], index: 4, kind: input, shape index: {}]
  %s5 = inlined_call_operand.vmem [shape: f32[1,128], index: 5, kind: input, shape index: {}]
  %s6 = inlined_call_operand.vmem [shape: f32[128,128], index: 6, kind: input, shape index: {}]
  %s7 = inlined_call_operand.vmem [shape: f32[1,128], index: 7, kind: input, shape index: {}]
  %s8 = inlined_call_operand.vmem [shape: f32[1,128], index: 8, kind: input, shape index: {}]
  %s9 = inlined_call_operand.vmem [shape: f32[128,128], index: 9, kind: input, shape index: {}]
  %s10 = inlined_call_operand.vmem [shape: f32[1,128], index: 10, kind: input, shape index: {}]
  %s11 = inlined_call_operand.hbm [shape: f32[2,128], index: 11, kind: output, shape index: {}]
  %s12 = sld [smem:[#allocation0]]
  $region54: #{vicreg_forward.1} parent=0
    _
  %s14 = ssub.s32 1, %s12
  %s15 = scalar_select 0, %s14, %s12
  $region1: #{vicreg_forward.1} parent=0
    #allocation2 [shape = 'u8[1024]{0}', space=vmem, size = 0x400, scoped, tag = 'output window, operand 0, single buffered']
    #allocation3 [shape = 's32[1]{0}', space=sflag, size = 0x4, scoped, tag = 'scoped memory for vicreg_forward.1']
    %16 = vsyncpa [#allocation3], 0
    // Predicated region
    $region2: #{vicreg_forward.1} parent=1 // pred_check
      _
    $region3: #{vicreg_forward.1} parent=1 // pred_check_branch
      %18 = sbr.rel (0) target = $region5
    $region4: #{vicreg_forward.1} parent=1 // pred_region
      _
    $region5: #{vicreg_forward.1} parent=1 // pred_fallthru
      _
    // Predicated region
    $region6: #{vicreg_forward.1} parent=1 // pred_check
      _
    $region7: #{vicreg_forward.1} parent=1 // pred_check_branch
      %20 = sbr.rel (0) target = $region9
    $region8: #{vicreg_forward.1} parent=1 // pred_region
      _
    $region9: #{vicreg_forward.1} parent=1 // pred_fallthru
      _
    // Predicated region
    $region10: #{vicreg_forward.1} parent=1 // pred_check
      _
    $region11: #{vicreg_forward.1} parent=1 // pred_check_branch
      %22 = sbr.rel (0) target = $region13
    $region12: #{vicreg_forward.1} parent=1 // pred_region
      _
    $region13: #{vicreg_forward.1} parent=1 // pred_fallthru
      _
    // Predicated region
    $region14: #{vicreg_forward.1} parent=1 // pred_check
      _
    $region15: #{vicreg_forward.1} parent=1 // pred_check_branch
      %24 = sbr.rel (0) target = $region17
    $region16: #{vicreg_forward.1} parent=1 // pred_region
      _
    $region17: #{vicreg_forward.1} parent=1 // pred_fallthru
      _
    // Predicated region
    $region18: #{vicreg_forward.1} parent=1 // pred_check
      _
    $region19: #{vicreg_forward.1} parent=1 // pred_check_branch
      %26 = sbr.rel (0) target = $region21
    $region20: #{vicreg_forward.1} parent=1 // pred_region
      _
    $region21: #{vicreg_forward.1} parent=1 // pred_fallthru
      _
    // Predicated region
    $region22: #{vicreg_forward.1} parent=1 // pred_check
      _
    $region23: #{vicreg_forward.1} parent=1 // pred_check_branch
      %28 = sbr.rel (0) target = $region25
    $region24: #{vicreg_forward.1} parent=1 // pred_region
      _
    $region25: #{vicreg_forward.1} parent=1 // pred_fallthru
      _
    // Predicated region
    $region26: #{vicreg_forward.1} parent=1 // pred_check
      _
    $region27: #{vicreg_forward.1} parent=1 // pred_check_branch
      %30 = sbr.rel (0) target = $region29
    $region28: #{vicreg_forward.1} parent=1 // pred_region
      _
    $region29: #{vicreg_forward.1} parent=1 // pred_fallthru
      _
    // Predicated region
    $region30: #{vicreg_forward.1} parent=1 // pred_check
      _
    $region31: #{vicreg_forward.1} parent=1 // pred_check_branch
      %32 = sbr.rel (0) target = $region33
    $region32: #{vicreg_forward.1} parent=1 // pred_region
      _
    $region33: #{vicreg_forward.1} parent=1 // pred_fallthru
      _
    // Predicated region
    $region34: #{vicreg_forward.1} parent=1 // pred_check
      _
    $region35: #{vicreg_forward.1} parent=1 // pred_check_branch
      %34 = sbr.rel (0) target = $region37
    $region36: #{vicreg_forward.1} parent=1 // pred_region
      _
    $region37: #{vicreg_forward.1} parent=1 // pred_fallthru
      _
    // Predicated region
    $region38: #{vicreg_forward.1} parent=1 // pred_check
      _
    $region39: #{vicreg_forward.1} parent=1 // pred_check_branch
      %36 = sbr.rel (0) target = $region41
    $region40: #{vicreg_forward.1} parent=1 // pred_region
      _
    $region41: #{vicreg_forward.1} parent=1 // pred_fallthru
      _
    // Predicated region
    $region42: #{vicreg_forward.1} parent=1 // pred_check
      _
    $region43: #{vicreg_forward.1} parent=1 // pred_check_branch
      %38 = sbr.rel (0) target = $region45
    $region44: #{vicreg_forward.1} parent=1 // pred_region
      _
    $region45: #{vicreg_forward.1} parent=1 // pred_fallthru
      _
    %v39 = vld [vmem:[%s0] sm:$0xff]
    %v40 = vld [vmem:[%s0 + $0x8] sm:$0xff]
    %v41 = vld [vmem:[%s0 + $0x10] sm:$0xff]
    %v42 = vld [vmem:[%s0 + $0x18] sm:$0xff]
    %v43 = vld [vmem:[%s0 + $0x20] sm:$0xff]
    %v44 = vld [vmem:[%s0 + $0x28] sm:$0xff]
    %v45 = vld [vmem:[%s0 + $0x30] sm:$0xff]
    %v46 = vld [vmem:[%s0 + $0x38] sm:$0xff]
    %v47 = vld [vmem:[%s0 + $0x40] sm:$0xff]
    %v48 = vld [vmem:[%s0 + $0x48] sm:$0xff]
    %v49 = vld [vmem:[%s0 + $0x50] sm:$0xff]
    %v50 = vld [vmem:[%s0 + $0x58] sm:$0xff]
    %v51 = vld [vmem:[%s0 + $0x60] sm:$0xff]
    %v52 = vld [vmem:[%s0 + $0x68] sm:$0xff]
    %v53 = vld [vmem:[%s0 + $0x70] sm:$0xff]
    %v54 = vld [vmem:[%s0 + $0x78] sm:$0xff]
    %v55 = vld [vmem:[%s0 + $0x80] sm:$0xff]
    %v56 = vld [vmem:[%s0 + $0x88] sm:$0xff]
    %v57 = vld [vmem:[%s0 + $0x90] sm:$0xff]
    %v58 = vld [vmem:[%s0 + $0x98] sm:$0xff]
    %v59 = vld [vmem:[%s0 + $0xa0] sm:$0xff]
    %v60 = vld [vmem:[%s0 + $0xa8] sm:$0xff]
    %v61 = vld [vmem:[%s0 + $0xb0] sm:$0xff]
    %v62 = vld [vmem:[%s0 + $0xb8] sm:$0xff]
    %v63 = vld [vmem:[%s0 + $0xc0] sm:$0xff]
    %v64 = vld [vmem:[%s0 + $0xc8] sm:$0xff]
    %v65 = vld [vmem:[%s0 + $0xd0] sm:$0xff]
    %v66 = vld [vmem:[%s0 + $0xd8] sm:$0xff]
    %v67 = vld [vmem:[%s0 + $0xe0] sm:$0xff]
    %v68 = vld [vmem:[%s0 + $0xe8] sm:$0xff]
    %v69 = vld [vmem:[%s0 + $0xf0] sm:$0xff]
    %v70 = vld [vmem:[%s0 + $0xf8] sm:$0xff]
    %v71 = vld [vmem:[%s0 + $0x100] sm:$0xff]
    %v72 = vld [vmem:[%s0 + $0x108] sm:$0xff]
    %v73 = vld [vmem:[%s0 + $0x110] sm:$0xff]
    %v74 = vld [vmem:[%s0 + $0x118] sm:$0xff]
    %v75 = vld [vmem:[%s0 + $0x120] sm:$0xff]
    %v76 = vld [vmem:[%s0 + $0x128] sm:$0xff]
    %v77 = vld [vmem:[%s0 + $0x130] sm:$0xff]
    %v78 = vld [vmem:[%s0 + $0x138] sm:$0xff]
    %v79 = vld [vmem:[%s0 + $0x140] sm:$0xff]
    %v80 = vld [vmem:[%s0 + $0x148] sm:$0xff]
    %v81 = vld [vmem:[%s0 + $0x150] sm:$0xff]
    %v82 = vld [vmem:[%s0 + $0x158] sm:$0xff]
    %v83 = vld [vmem:[%s0 + $0x160] sm:$0xff]
    %v84 = vld [vmem:[%s0 + $0x168] sm:$0xff]
    %v85 = vld [vmem:[%s0 + $0x170] sm:$0xff]
    %v86 = vld [vmem:[%s0 + $0x178] sm:$0xff]
    %v87 = vld [vmem:[%s0 + $0x180] sm:$0xff]
    %v88 = vld [vmem:[%s0 + $0x188] sm:$0xff]
    %v89 = vld [vmem:[%s0 + $0x190] sm:$0xff]
    %v90 = vld [vmem:[%s0 + $0x198] sm:$0xff]
    %v91 = vld [vmem:[%s0 + $0x1a0] sm:$0xff]
    %v92 = vld [vmem:[%s0 + $0x1a8] sm:$0xff]
    %v93 = vld [vmem:[%s0 + $0x1b0] sm:$0xff]
    %v94 = vld [vmem:[%s0 + $0x1b8] sm:$0xff]
    %v95 = vld [vmem:[%s0 + $0x1c0] sm:$0xff]
    %v96 = vld [vmem:[%s0 + $0x1c8] sm:$0xff]
    %v97 = vld [vmem:[%s0 + $0x1d0] sm:$0xff]
    %v98 = vld [vmem:[%s0 + $0x1d8] sm:$0xff]
    %v99 = vld [vmem:[%s0 + $0x1e0] sm:$0xff]
    %v100 = vld [vmem:[%s0 + $0x1e8] sm:$0xff]
    %v101 = vld [vmem:[%s0 + $0x1f0] sm:$0xff]
    %v102 = vld [vmem:[%s0 + $0x1f8] sm:$0xff]
    %v103 = vld [vmem:[%s1] sm:$0xf]
    %v104 = vld [vmem:[%s2] sm:$0x1]
    %v106 = vlaneseq
    %v107 = vshrl.u32 %v106, 7
    %v108 = vsub.s32 0, %v107
    %v109 = vrot.slane %v104, %v108
    %vm111 = vcmask 31744
    %v113 = vsel %vm111, %v39, 0
    %v116 = vsel %vm111, %v40, 0
    %v119 = vsel %vm111, %v41, 0
    %v122 = vsel %vm111, %v42, 0
    %v125 = vsel %vm111, %v43, 0
    %v128 = vsel %vm111, %v44, 0
    %v131 = vsel %vm111, %v45, 0
    %v134 = vsel %vm111, %v46, 0
    %v137 = vsel %vm111, %v47, 0
    %v140 = vsel %vm111, %v48, 0
    %v143 = vsel %vm111, %v49, 0
    %v146 = vsel %vm111, %v50, 0
    %v149 = vsel %vm111, %v51, 0
    %v152 = vsel %vm111, %v52, 0
    %v155 = vsel %vm111, %v53, 0
    %v158 = vsel %vm111, %v54, 0
    %v161 = vsel %vm111, %v55, 0
    %v164 = vsel %vm111, %v56, 0
    %v167 = vsel %vm111, %v57, 0
    %v170 = vsel %vm111, %v58, 0
    %v173 = vsel %vm111, %v59, 0
    %v176 = vsel %vm111, %v60, 0
    %v179 = vsel %vm111, %v61, 0
    %v182 = vsel %vm111, %v62, 0
    %v185 = vsel %vm111, %v63, 0
    %v188 = vsel %vm111, %v64, 0
    %v191 = vsel %vm111, %v65, 0
    %v194 = vsel %vm111, %v66, 0
    %v197 = vsel %vm111, %v67, 0
    %v200 = vsel %vm111, %v68, 0
    %v203 = vsel %vm111, %v69, 0
    %v206 = vsel %vm111, %v70, 0
    %v209 = vsel %vm111, %v71, 0
    %v212 = vsel %vm111, %v72, 0
    %v215 = vsel %vm111, %v73, 0
    %v218 = vsel %vm111, %v74, 0
    %v221 = vsel %vm111, %v75, 0
    %v224 = vsel %vm111, %v76, 0
    %v227 = vsel %vm111, %v77, 0
    %v230 = vsel %vm111, %v78, 0
    %v233 = vsel %vm111, %v79, 0
    %v236 = vsel %vm111, %v80, 0
    %v239 = vsel %vm111, %v81, 0
    %v242 = vsel %vm111, %v82, 0
    %v245 = vsel %vm111, %v83, 0
    %v248 = vsel %vm111, %v84, 0
    %v251 = vsel %vm111, %v85, 0
    %v254 = vsel %vm111, %v86, 0
    %v257 = vsel %vm111, %v87, 0
    %v260 = vsel %vm111, %v88, 0
    %v263 = vsel %vm111, %v89, 0
    %v266 = vsel %vm111, %v90, 0
    %v269 = vsel %vm111, %v91, 0
    %v272 = vsel %vm111, %v92, 0
    %v275 = vsel %vm111, %v93, 0
    %v278 = vsel %vm111, %v94, 0
    %v281 = vsel %vm111, %v95, 0
    %v284 = vsel %vm111, %v96, 0
    %v287 = vsel %vm111, %v97, 0
    %v290 = vsel %vm111, %v98, 0
    %v293 = vsel %vm111, %v99, 0
    %v296 = vsel %vm111, %v100, 0
    %v299 = vsel %vm111, %v101, 0
    %v302 = vsel %vm111, %v102, 0
    %vm304 = vcmask 1043456
    %v306 = vsel %vm304, %v103, 0
    %308 = vmatprep.subr.mxu0 0.0
    %309 = vmatpush1.msra.mxu0 %v306
    %310 = vmatprep.subr.mxu0 0.0
    %311 = vmatpush1.msra.mxu0 0.0
    %312 = vmatprep.subr.mxu0 0.0
    %313 = vmatpush1.msra.mxu0 0.0
    %314 = vmatprep.subr.mxu0 0.0
    %315 = vmatpush1.msra.mxu0 0.0
    %316 = vmatprep.subr.mxu0 0.0
    %317 = vmatpush1.msra.mxu0 0.0
    %318 = vmatprep.subr.mxu0 0.0
    %319 = vmatpush1.msra.mxu0 0.0
    %320 = vmatprep.subr.mxu0 0.0
    %321 = vmatpush1.msra.mxu0 0.0
    %322 = vmatprep.subr.mxu0 0.0
    %323 = vmatpush1.msra.mxu0 0.0
    %324 = vmatprep.subr.mxu0 0.0
    %325 = vmatpush1.msra.mxu0 0.0
    %326 = vmatprep.subr.mxu0 0.0
    %327 = vmatpush1.msra.mxu0 0.0
    %328 = vmatprep.subr.mxu0 0.0
    %329 = vmatpush1.msra.mxu0 0.0
    %330 = vmatprep.subr.mxu0 0.0
    %331 = vmatpush1.msra.mxu0 0.0
    %332 = vmatprep.subr.mxu0 0.0
    %333 = vmatpush1.msra.mxu0 0.0
    %334 = vmatprep.subr.mxu0 0.0
    %335 = vmatpush1.msra.mxu0 0.0
    %336 = vmatprep.subr.mxu0 0.0
    %337 = vmatpush1.msra.mxu0 0.0
    %338 = vmatprep.subr.mxu0 0.0
    %339 = vmatpush1.msra.mxu0 0.0
    %340 = vmatprep.subr.mxu0 0.0
    %341 = vmatpush1.msra.mxu0 0.0
    %342 = vmatprep.subr.mxu0 0.0
    %343 = vmatpush1.msra.mxu0 0.0
    %344 = vmatprep.subr.mxu0 0.0
    %345 = vmatpush1.msra.mxu0 0.0
    %346 = vmatprep.subr.mxu0 0.0
    %347 = vmatpush1.msra.mxu0 0.0
    %348 = vmatprep.subr.mxu0 0.0
    %349 = vmatpush1.msra.mxu0 0.0
    %350 = vmatprep.subr.mxu0 0.0
    %351 = vmatpush1.msra.mxu0 0.0
    %352 = vmatprep.subr.mxu0 0.0
    %353 = vmatpush1.msra.mxu0 0.0
    %354 = vmatprep.subr.mxu0 0.0
    %355 = vmatpush1.msra.mxu0 0.0
    %356 = vmatprep.subr.mxu0 0.0
    %357 = vmatpush1.msra.mxu0 0.0
    %358 = vmatprep.subr.mxu0 0.0
    %359 = vmatpush1.msra.mxu0 0.0
    %360 = vmatprep.subr.mxu0 0.0
    %361 = vmatpush1.msra.mxu0 0.0
    %362 = vmatprep.subr.mxu0 0.0
    %363 = vmatpush1.msra.mxu0 0.0
    %364 = vmatprep.subr.mxu0 0.0
    %365 = vmatpush1.msra.mxu0 0.0
    %366 = vmatprep.subr.mxu0 0.0
    %367 = vmatpush1.msra.mxu0 0.0
    %368 = vmatprep.subr.mxu0 0.0
    %369 = vmatpush1.msra.mxu0 0.0
    %370 = vmatprep.subr.mxu0 0.0
    %371 = vmatpush1.msra.mxu0 0.0
    %372 = vmatprep.mubr.f32.mxu0 0.0
    %373 = vmatmul.mubr.f32.gmra.mrb[0].mxu0 %v113
    %v374 = vpop.f32.mrb[0].mxu0
    %v375 = vadd.f32 %v109, %v374
    %v376 = vpop.f32.mrb[0].mxu0
    %377 = vmatprep.mubr.f32.mxu0 0.0
    %378 = vmatmul.mubr.f32.gmra.mrb[0].mxu0 %v116
    %v379 = vpop.f32.mrb[0].mxu0
    %v380 = vadd.f32 %v109, %v379
    %v381 = vpop.f32.mrb[0].mxu0
    %382 = vmatprep.mubr.f32.mxu0 0.0
    %383 = vmatmul.mubr.f32.gmra.mrb[0].mxu0 %v119
    %v384 = vpop.f32.mrb[0].mxu0
    %v385 = vadd.f32 %v109, %v384
    %v386 = vpop.f32.mrb[0].mxu0
    %387 = vmatprep.mubr.f32.mxu0 0.0
    %388 = vmatmul.mubr.f32.gmra.mrb[0].mxu0 %v122
    %v389 = vpop.f32.mrb[0].mxu0
    %v390 = vadd.f32 %v109, %v389
    %v391 = vpop.f32.mrb[0].mxu0
    %392 = vmatprep.mubr.f32.mxu0 0.0
    %393 = vmatmul.mubr.f32.gmra.mrb[0].mxu0 %v125
    %v394 = vpop.f32.mrb[0].mxu0
    %v395 = vadd.f32 %v109, %v394
    %v396 = vpop.f32.mrb[0].mxu0
    %397 = vmatprep.mubr.f32.mxu0 0.0
    %398 = vmatmul.mubr.f32.gmra.mrb[0].mxu0 %v128
    %v399 = vpop.f32.mrb[0].mxu0
    %v400 = vadd.f32 %v109, %v399
    %v401 = vpop.f32.mrb[0].mxu0
    %402 = vmatprep.mubr.f32.mxu0 0.0
    %403 = vmatmul.mubr.f32.gmra.mrb[0].mxu0 %v131
    %v404 = vpop.f32.mrb[0].mxu0
    %v405 = vadd.f32 %v109, %v404
    %v406 = vpop.f32.mrb[0].mxu0
    %407 = vmatprep.mubr.f32.mxu0 0.0
    %408 = vmatmul.mubr.f32.gmra.mrb[0].mxu0 %v134
    %v409 = vpop.f32.mrb[0].mxu0
    %v410 = vadd.f32 %v109, %v409
    %v411 = vpop.f32.mrb[0].mxu0
    %412 = vmatprep.mubr.f32.mxu0 0.0
    %413 = vmatmul.mubr.f32.gmra.mrb[0].mxu0 %v137
    %v414 = vpop.f32.mrb[0].mxu0
    %v415 = vadd.f32 %v109, %v414
    %v416 = vpop.f32.mrb[0].mxu0
    %417 = vmatprep.mubr.f32.mxu0 0.0
    %418 = vmatmul.mubr.f32.gmra.mrb[0].mxu0 %v140
    %v419 = vpop.f32.mrb[0].mxu0
    %v420 = vadd.f32 %v109, %v419
    %v421 = vpop.f32.mrb[0].mxu0
    %422 = vmatprep.mubr.f32.mxu0 0.0
    %423 = vmatmul.mubr.f32.gmra.mrb[0].mxu0 %v143
    %v424 = vpop.f32.mrb[0].mxu0
    %v425 = vadd.f32 %v109, %v424
    %v426 = vpop.f32.mrb[0].mxu0
    %427 = vmatprep.mubr.f32.mxu0 0.0
    %428 = vmatmul.mubr.f32.gmra.mrb[0].mxu0 %v146
    %v429 = vpop.f32.mrb[0].mxu0
    %v430 = vadd.f32 %v109, %v429
    %v431 = vpop.f32.mrb[0].mxu0
    %432 = vmatprep.mubr.f32.mxu0 0.0
    %433 = vmatmul.mubr.f32.gmra.mrb[0].mxu0 %v149
    %v434 = vpop.f32.mrb[0].mxu0
    %v435 = vadd.f32 %v109, %v434
    %v436 = vpop.f32.mrb[0].mxu0
    %437 = vmatprep.mubr.f32.mxu0 0.0
    %438 = vmatmul.mubr.f32.gmra.mrb[0].mxu0 %v152
    %v439 = vpop.f32.mrb[0].mxu0
    %v440 = vadd.f32 %v109, %v439
    %v441 = vpop.f32.mrb[0].mxu0
    %442 = vmatprep.mubr.f32.mxu0 0.0
    %443 = vmatmul.mubr.f32.gmra.mrb[0].mxu0 %v155
    %v444 = vpop.f32.mrb[0].mxu0
    %v445 = vadd.f32 %v109, %v444
    %v446 = vpop.f32.mrb[0].mxu0
    %447 = vmatprep.mubr.f32.mxu0 0.0
    %448 = vmatmul.mubr.f32.gmra.mrb[0].mxu0 %v158
    %v449 = vpop.f32.mrb[0].mxu0
    %v450 = vadd.f32 %v109, %v449
    %v451 = vpop.f32.mrb[0].mxu0
    %452 = vmatprep.mubr.f32.mxu0 0.0
    %453 = vmatmul.mubr.f32.gmra.mrb[0].mxu0 %v161
    %v454 = vpop.f32.mrb[0].mxu0
    %v455 = vadd.f32 %v109, %v454
    %v456 = vpop.f32.mrb[0].mxu0
    %457 = vmatprep.mubr.f32.mxu0 0.0
    %458 = vmatmul.mubr.f32.gmra.mrb[0].mxu0 %v164
    %v459 = vpop.f32.mrb[0].mxu0
    %v460 = vadd.f32 %v109, %v459
    %v461 = vpop.f32.mrb[0].mxu0
    %462 = vmatprep.mubr.f32.mxu0 0.0
    %463 = vmatmul.mubr.f32.gmra.mrb[0].mxu0 %v167
    %v464 = vpop.f32.mrb[0].mxu0
    %v465 = vadd.f32 %v109, %v464
    %v466 = vpop.f32.mrb[0].mxu0
    %467 = vmatprep.mubr.f32.mxu0 0.0
    %468 = vmatmul.mubr.f32.gmra.mrb[0].mxu0 %v170
    %v469 = vpop.f32.mrb[0].mxu0
    %v470 = vadd.f32 %v109, %v469
    %v471 = vpop.f32.mrb[0].mxu0
    %472 = vmatprep.mubr.f32.mxu0 0.0
    %473 = vmatmul.mubr.f32.gmra.mrb[0].mxu0 %v173
    %v474 = vpop.f32.mrb[0].mxu0
    %v475 = vadd.f32 %v109, %v474
    %v476 = vpop.f32.mrb[0].mxu0
    %477 = vmatprep.mubr.f32.mxu0 0.0
    %478 = vmatmul.mubr.f32.gmra.mrb[0].mxu0 %v176
    %v479 = vpop.f32.mrb[0].mxu0
    %v480 = vadd.f32 %v109, %v479
    %v481 = vpop.f32.mrb[0].mxu0
    %482 = vmatprep.mubr.f32.mxu0 0.0
    %483 = vmatmul.mubr.f32.gmra.mrb[0].mxu0 %v179
    %v484 = vpop.f32.mrb[0].mxu0
    %v485 = vadd.f32 %v109, %v484
    %v486 = vpop.f32.mrb[0].mxu0
    %487 = vmatprep.mubr.f32.mxu0 0.0
    %488 = vmatmul.mubr.f32.gmra.mrb[0].mxu0 %v182
    %v489 = vpop.f32.mrb[0].mxu0
    %v490 = vadd.f32 %v109, %v489
    %v491 = vpop.f32.mrb[0].mxu0
    %492 = vmatprep.mubr.f32.mxu0 0.0
    %493 = vmatmul.mubr.f32.gmra.mrb[0].mxu0 %v185
    %v494 = vpop.f32.mrb[0].mxu0
    %v495 = vadd.f32 %v109, %v494
    %v496 = vpop.f32.mrb[0].mxu0
    %497 = vmatprep.mubr.f32.mxu0 0.0
    %498 = vmatmul.mubr.f32.gmra.mrb[0].mxu0 %v188
    %v499 = vpop.f32.mrb[0].mxu0
    %v500 = vadd.f32 %v109, %v499
    %v501 = vpop.f32.mrb[0].mxu0
    %502 = vmatprep.mubr.f32.mxu0 0.0
    %503 = vmatmul.mubr.f32.gmra.mrb[0].mxu0 %v191
    %v504 = vpop.f32.mrb[0].mxu0
    %v505 = vadd.f32 %v109, %v504
    %v506 = vpop.f32.mrb[0].mxu0
    %507 = vmatprep.mubr.f32.mxu0 0.0
    %508 = vmatmul.mubr.f32.gmra.mrb[0].mxu0 %v194
    %v509 = vpop.f32.mrb[0].mxu0
    %v510 = vadd.f32 %v109, %v509
    %v511 = vpop.f32.mrb[0].mxu0
    %512 = vmatprep.mubr.f32.mxu0 0.0
    %513 = vmatmul.mubr.f32.gmra.mrb[0].mxu0 %v197
    %v514 = vpop.f32.mrb[0].mxu0
    %v515 = vadd.f32 %v109, %v514
    %v516 = vpop.f32.mrb[0].mxu0
    %517 = vmatprep.mubr.f32.mxu0 0.0
    %518 = vmatmul.mubr.f32.gmra.mrb[0].mxu0 %v200
    %v519 = vpop.f32.mrb[0].mxu0
    %v520 = vadd.f32 %v109, %v519
    %v521 = vpop.f32.mrb[0].mxu0
    %522 = vmatprep.mubr.f32.mxu0 0.0
    %523 = vmatmul.mubr.f32.gmra.mrb[0].mxu0 %v203
    %v524 = vpop.f32.mrb[0].mxu0
    %v525 = vadd.f32 %v109, %v524
    %v526 = vpop.f32.mrb[0].mxu0
    %527 = vmatprep.mubr.f32.mxu0 0.0
    %528 = vmatmul.mubr.f32.gmra.mrb[0].mxu0 %v206
    %v529 = vpop.f32.mrb[0].mxu0
    %v530 = vadd.f32 %v109, %v529
    %v531 = vpop.f32.mrb[0].mxu0
    %532 = vmatprep.mubr.f32.mxu0 0.0
    %533 = vmatmul.mubr.f32.gmra.mrb[0].mxu0 %v209
    %v534 = vpop.f32.mrb[0].mxu0
    %v535 = vadd.f32 %v109, %v534
    %v536 = vpop.f32.mrb[0].mxu0
    %537 = vmatprep.mubr.f32.mxu0 0.0
    %538 = vmatmul.mubr.f32.gmra.mrb[0].mxu0 %v212
    %v539 = vpop.f32.mrb[0].mxu0
    %v540 = vadd.f32 %v109, %v539
    %v541 = vpop.f32.mrb[0].mxu0
    %542 = vmatprep.mubr.f32.mxu0 0.0
    %543 = vmatmul.mubr.f32.gmra.mrb[0].mxu0 %v215
    %v544 = vpop.f32.mrb[0].mxu0
    %v545 = vadd.f32 %v109, %v544
    %v546 = vpop.f32.mrb[0].mxu0
    %547 = vmatprep.mubr.f32.mxu0 0.0
    %548 = vmatmul.mubr.f32.gmra.mrb[0].mxu0 %v218
    %v549 = vpop.f32.mrb[0].mxu0
    %v550 = vadd.f32 %v109, %v549
    %v551 = vpop.f32.mrb[0].mxu0
    %552 = vmatprep.mubr.f32.mxu0 0.0
    %553 = vmatmul.mubr.f32.gmra.mrb[0].mxu0 %v221
    %v554 = vpop.f32.mrb[0].mxu0
    %v555 = vadd.f32 %v109, %v554
    %v556 = vpop.f32.mrb[0].mxu0
    %557 = vmatprep.mubr.f32.mxu0 0.0
    %558 = vmatmul.mubr.f32.gmra.mrb[0].mxu0 %v224
    %v559 = vpop.f32.mrb[0].mxu0
    %v560 = vadd.f32 %v109, %v559
    %v561 = vpop.f32.mrb[0].mxu0
    %562 = vmatprep.mubr.f32.mxu0 0.0
    %563 = vmatmul.mubr.f32.gmra.mrb[0].mxu0 %v227
    %v564 = vpop.f32.mrb[0].mxu0
    %v565 = vadd.f32 %v109, %v564
    %v566 = vpop.f32.mrb[0].mxu0
    %567 = vmatprep.mubr.f32.mxu0 0.0
    %568 = vmatmul.mubr.f32.gmra.mrb[0].mxu0 %v230
    %v569 = vpop.f32.mrb[0].mxu0
    %v570 = vadd.f32 %v109, %v569
    %v571 = vpop.f32.mrb[0].mxu0
    %572 = vmatprep.mubr.f32.mxu0 0.0
    %573 = vmatmul.mubr.f32.gmra.mrb[0].mxu0 %v233
    %v574 = vpop.f32.mrb[0].mxu0
    %v575 = vadd.f32 %v109, %v574
    %v576 = vpop.f32.mrb[0].mxu0
    %577 = vmatprep.mubr.f32.mxu0 0.0
    %578 = vmatmul.mubr.f32.gmra.mrb[0].mxu0 %v236
    %v579 = vpop.f32.mrb[0].mxu0
    %v580 = vadd.f32 %v109, %v579
    %v581 = vpop.f32.mrb[0].mxu0
    %582 = vmatprep.mubr.f32.mxu0 0.0
    %583 = vmatmul.mubr.f32.gmra.mrb[0].mxu0 %v239
    %v584 = vpop.f32.mrb[0].mxu0
    %v585 = vadd.f32 %v109, %v584
    %v586 = vpop.f32.mrb[0].mxu0
    %587 = vmatprep.mubr.f32.mxu0 0.0
    %588 = vmatmul.mubr.f32.gmra.mrb[0].mxu0 %v242
    %v589 = vpop.f32.mrb[0].mxu0
    %v590 = vadd.f32 %v109, %v589
    %v591 = vpop.f32.mrb[0].mxu0
    %592 = vmatprep.mubr.f32.mxu0 0.0
    %593 = vmatmul.mubr.f32.gmra.mrb[0].mxu0 %v245
    %v594 = vpop.f32.mrb[0].mxu0
    %v595 = vadd.f32 %v109, %v594
    %v596 = vpop.f32.mrb[0].mxu0
    %597 = vmatprep.mubr.f32.mxu0 0.0
    %598 = vmatmul.mubr.f32.gmra.mrb[0].mxu0 %v248
    %v599 = vpop.f32.mrb[0].mxu0
    %v600 = vadd.f32 %v109, %v599
    %v601 = vpop.f32.mrb[0].mxu0
    %602 = vmatprep.mubr.f32.mxu0 0.0
    %603 = vmatmul.mubr.f32.gmra.mrb[0].mxu0 %v251
    %v604 = vpop.f32.mrb[0].mxu0
    %v605 = vadd.f32 %v109, %v604
    %v606 = vpop.f32.mrb[0].mxu0
    %607 = vmatprep.mubr.f32.mxu0 0.0
    %608 = vmatmul.mubr.f32.gmra.mrb[0].mxu0 %v254
    %v609 = vpop.f32.mrb[0].mxu0
    %v610 = vadd.f32 %v109, %v609
    %v611 = vpop.f32.mrb[0].mxu0
    %612 = vmatprep.mubr.f32.mxu0 0.0
    %613 = vmatmul.mubr.f32.gmra.mrb[0].mxu0 %v257
    %v614 = vpop.f32.mrb[0].mxu0
    %v615 = vadd.f32 %v109, %v614
    %v616 = vpop.f32.mrb[0].mxu0
    %617 = vmatprep.mubr.f32.mxu0 0.0
    %618 = vmatmul.mubr.f32.gmra.mrb[0].mxu0 %v260
    %v619 = vpop.f32.mrb[0].mxu0
    %v620 = vadd.f32 %v109, %v619
    %v621 = vpop.f32.mrb[0].mxu0
    %622 = vmatprep.mubr.f32.mxu0 0.0
    %623 = vmatmul.mubr.f32.gmra.mrb[0].mxu0 %v263
    %v624 = vpop.f32.mrb[0].mxu0
    %v625 = vadd.f32 %v109, %v624
    %v626 = vpop.f32.mrb[0].mxu0
    %627 = vmatprep.mubr.f32.mxu0 0.0
    %628 = vmatmul.mubr.f32.gmra.mrb[0].mxu0 %v266
    %v629 = vpop.f32.mrb[0].mxu0
    %v630 = vadd.f32 %v109, %v629
    %v631 = vpop.f32.mrb[0].mxu0
    %632 = vmatprep.mubr.f32.mxu0 0.0
    %633 = vmatmul.mubr.f32.gmra.mrb[0].mxu0 %v269
    %v634 = vpop.f32.mrb[0].mxu0
    %v635 = vadd.f32 %v109, %v634
    %v636 = vpop.f32.mrb[0].mxu0
    %637 = vmatprep.mubr.f32.mxu0 0.0
    %638 = vmatmul.mubr.f32.gmra.mrb[0].mxu0 %v272
    %v639 = vpop.f32.mrb[0].mxu0
    %v640 = vadd.f32 %v109, %v639
    %v641 = vpop.f32.mrb[0].mxu0
    %642 = vmatprep.mubr.f32.mxu0 0.0
    %643 = vmatmul.mubr.f32.gmra.mrb[0].mxu0 %v275
    %v644 = vpop.f32.mrb[0].mxu0
    %v645 = vadd.f32 %v109, %v644
    %v646 = vpop.f32.mrb[0].mxu0
    %647 = vmatprep.mubr.f32.mxu0 0.0
    %648 = vmatmul.mubr.f32.gmra.mrb[0].mxu0 %v278
    %v649 = vpop.f32.mrb[0].mxu0
    %v650 = vadd.f32 %v109, %v649
    %v651 = vpop.f32.mrb[0].mxu0
    %652 = vmatprep.mubr.f32.mxu0 0.0
    %653 = vmatmul.mubr.f32.gmra.mrb[0].mxu0 %v281
    %v654 = vpop.f32.mrb[0].mxu0
    %v655 = vadd.f32 %v109, %v654
    %v656 = vpop.f32.mrb[0].mxu0
    %657 = vmatprep.mubr.f32.mxu0 0.0
    %658 = vmatmul.mubr.f32.gmra.mrb[0].mxu0 %v284
    %v659 = vpop.f32.mrb[0].mxu0
    %v660 = vadd.f32 %v109, %v659
    %v661 = vpop.f32.mrb[0].mxu0
    %662 = vmatprep.mubr.f32.mxu0 0.0
    %663 = vmatmul.mubr.f32.gmra.mrb[0].mxu0 %v287
    %v664 = vpop.f32.mrb[0].mxu0
    %v665 = vadd.f32 %v109, %v664
    %v666 = vpop.f32.mrb[0].mxu0
    %667 = vmatprep.mubr.f32.mxu0 0.0
    %668 = vmatmul.mubr.f32.gmra.mrb[0].mxu0 %v290
    %v669 = vpop.f32.mrb[0].mxu0
    %v670 = vadd.f32 %v109, %v669
    %v671 = vpop.f32.mrb[0].mxu0
    %672 = vmatprep.mubr.f32.mxu0 0.0
    %673 = vmatmul.mubr.f32.gmra.mrb[0].mxu0 %v293
    %v674 = vpop.f32.mrb[0].mxu0
    %v675 = vadd.f32 %v109, %v674
    %v676 = vpop.f32.mrb[0].mxu0
    %677 = vmatprep.mubr.f32.mxu0 0.0
    %678 = vmatmul.mubr.f32.gmra.mrb[0].mxu0 %v296
    %v679 = vpop.f32.mrb[0].mxu0
    %v680 = vadd.f32 %v109, %v679
    %v681 = vpop.f32.mrb[0].mxu0
    %682 = vmatprep.mubr.f32.mxu0 0.0
    %683 = vmatmul.mubr.f32.gmra.mrb[0].mxu0 %v299
    %v684 = vpop.f32.mrb[0].mxu0
    %v685 = vadd.f32 %v109, %v684
    %v686 = vpop.f32.mrb[0].mxu0
    %687 = vmatprep.mubr.f32.mxu0 0.0
    %688 = vmatmul.mubr.f32.gmra.mrb[0].mxu0 %v302
    %v689 = vpop.f32.mrb[0].mxu0
    %v690 = vadd.f32 %v109, %v689
    %v691 = vpop.f32.mrb[0].mxu0
    %692 = vdwg.mxu0
    %v693 = vmax.f32 %v375, 0.0
    %v694 = vmax.f32 %v380, 0.0
    %v695 = vmax.f32 %v385, 0.0
    %v696 = vmax.f32 %v390, 0.0
    %v697 = vmax.f32 %v395, 0.0
    %v698 = vmax.f32 %v400, 0.0
    %v699 = vmax.f32 %v405, 0.0
    %v700 = vmax.f32 %v410, 0.0
    %v701 = vmax.f32 %v415, 0.0
    %v702 = vmax.f32 %v420, 0.0
    %v703 = vmax.f32 %v425, 0.0
    %v704 = vmax.f32 %v430, 0.0
    %v705 = vmax.f32 %v435, 0.0
    %v706 = vmax.f32 %v440, 0.0
    %v707 = vmax.f32 %v445, 0.0
    %v708 = vmax.f32 %v450, 0.0
    %v709 = vmax.f32 %v455, 0.0
    %v710 = vmax.f32 %v460, 0.0
    %v711 = vmax.f32 %v465, 0.0
    %v712 = vmax.f32 %v470, 0.0
    %v713 = vmax.f32 %v475, 0.0
    %v714 = vmax.f32 %v480, 0.0
    %v715 = vmax.f32 %v485, 0.0
    %v716 = vmax.f32 %v490, 0.0
    %v717 = vmax.f32 %v495, 0.0
    %v718 = vmax.f32 %v500, 0.0
    %v719 = vmax.f32 %v505, 0.0
    %v720 = vmax.f32 %v510, 0.0
    %v721 = vmax.f32 %v515, 0.0
    %v722 = vmax.f32 %v520, 0.0
    %v723 = vmax.f32 %v525, 0.0
    %v724 = vmax.f32 %v530, 0.0
    %v725 = vmax.f32 %v535, 0.0
    %v726 = vmax.f32 %v540, 0.0
    %v727 = vmax.f32 %v545, 0.0
    %v728 = vmax.f32 %v550, 0.0
    %v729 = vmax.f32 %v555, 0.0
    %v730 = vmax.f32 %v560, 0.0
    %v731 = vmax.f32 %v565, 0.0
    %v732 = vmax.f32 %v570, 0.0
    %v733 = vmax.f32 %v575, 0.0
    %v734 = vmax.f32 %v580, 0.0
    %v735 = vmax.f32 %v585, 0.0
    %v736 = vmax.f32 %v590, 0.0
    %v737 = vmax.f32 %v595, 0.0
    %v738 = vmax.f32 %v600, 0.0
    %v739 = vmax.f32 %v605, 0.0
    %v740 = vmax.f32 %v610, 0.0
    %v741 = vmax.f32 %v615, 0.0
    %v742 = vmax.f32 %v620, 0.0
    %v743 = vmax.f32 %v625, 0.0
    %v744 = vmax.f32 %v630, 0.0
    %v745 = vmax.f32 %v635, 0.0
    %v746 = vmax.f32 %v640, 0.0
    %v747 = vmax.f32 %v645, 0.0
    %v748 = vmax.f32 %v650, 0.0
    %v749 = vmax.f32 %v655, 0.0
    %v750 = vmax.f32 %v660, 0.0
    %v751 = vmax.f32 %v665, 0.0
    %v752 = vmax.f32 %v670, 0.0
    %v753 = vmax.f32 %v675, 0.0
    %v754 = vmax.f32 %v680, 0.0
    %v755 = vmax.f32 %v685, 0.0
    %v756 = vmax.f32 %v690, 0.0
    %v757 = vadd.f32 %v693, %v694
    %v758 = vadd.f32 %v757, %v695
    %v759 = vadd.f32 %v758, %v696
    %v760 = vadd.f32 %v759, %v697
    %v761 = vadd.f32 %v760, %v698
    %v762 = vadd.f32 %v761, %v699
    %v763 = vadd.f32 %v762, %v700
    %v764 = vadd.f32 %v763, %v701
    %v765 = vadd.f32 %v764, %v702
    %v766 = vadd.f32 %v765, %v703
    %v767 = vadd.f32 %v766, %v704
    %v768 = vadd.f32 %v767, %v705
    %v769 = vadd.f32 %v768, %v706
    %v770 = vadd.f32 %v769, %v707
    %v771 = vadd.f32 %v770, %v708
    %v772 = vadd.f32 %v771, %v709
    %v773 = vadd.f32 %v772, %v710
    %v774 = vadd.f32 %v773, %v711
    %v775 = vadd.f32 %v774, %v712
    %v776 = vadd.f32 %v775, %v713
    %v777 = vadd.f32 %v776, %v714
    %v778 = vadd.f32 %v777, %v715
    %v779 = vadd.f32 %v778, %v716
    %v780 = vadd.f32 %v779, %v717
    %v781 = vadd.f32 %v780, %v718
    %v782 = vadd.f32 %v781, %v719
    %v783 = vadd.f32 %v782, %v720
    %v784 = vadd.f32 %v783, %v721
    %v785 = vadd.f32 %v784, %v722
    %v786 = vadd.f32 %v785, %v723
    %v787 = vadd.f32 %v786, %v724
    %v788 = vrot.slane %v787, 4
    %v789 = vadd.f32 %v787, %v788
    %v790 = vrot.slane %v789, 2
    %v791 = vadd.f32 %v789, %v790
    %v792 = vrot.slane %v791, 1
    %v793 = vadd.f32 %v791, %v792
    %v794 = vrcp.pop 256.0
    %v795 = vmul.f32 %v793, %v794
    %v796 = vadd.f32 %v725, %v726
    %v797 = vadd.f32 %v796, %v727
    %v798 = vadd.f32 %v797, %v728
    %v799 = vadd.f32 %v798, %v729
    %v800 = vadd.f32 %v799, %v730
    %v801 = vadd.f32 %v800, %v731
    %v802 = vadd.f32 %v801, %v732
    %v803 = vadd.f32 %v802, %v733
    %v804 = vadd.f32 %v803, %v734
    %v805 = vadd.f32 %v804, %v735
    %v806 = vadd.f32 %v805, %v736
    %v807 = vadd.f32 %v806, %v737
    %v808 = vadd.f32 %v807, %v738
    %v809 = vadd.f32 %v808, %v739
    %v810 = vadd.f32 %v809, %v740
    %v811 = vadd.f32 %v810, %v741
    %v812 = vadd.f32 %v811, %v742
    %v813 = vadd.f32 %v812, %v743
    %v814 = vadd.f32 %v813, %v744
    %v815 = vadd.f32 %v814, %v745
    %v816 = vadd.f32 %v815, %v746
    %v817 = vadd.f32 %v816, %v747
    %v818 = vadd.f32 %v817, %v748
    %v819 = vadd.f32 %v818, %v749
    %v820 = vadd.f32 %v819, %v750
    %v821 = vadd.f32 %v820, %v751
    %v822 = vadd.f32 %v821, %v752
    %v823 = vadd.f32 %v822, %v753
    %v824 = vadd.f32 %v823, %v754
    %v825 = vadd.f32 %v824, %v755
    %v826 = vadd.f32 %v825, %v756
    %v827 = vrot.slane %v826, 4
    %v828 = vadd.f32 %v826, %v827
    %v829 = vrot.slane %v828, 2
    %v830 = vadd.f32 %v828, %v829
    %v831 = vrot.slane %v830, 1
    %v832 = vadd.f32 %v830, %v831
    %v833 = vmul.f32 %v832, %v794
    %vm834 = vcmask 1040384
    %v835 = vsel %vm834, %v795, %v833
    %v836 = vld [vmem:[%s3] sm:$0xff]
    %v837 = vld [vmem:[%s3 + $0x8] sm:$0xff]
    %v838 = vld [vmem:[%s3 + $0x10] sm:$0xff]
    %v839 = vld [vmem:[%s3 + $0x18] sm:$0xff]
    %v840 = vld [vmem:[%s3 + $0x20] sm:$0xff]
    %v841 = vld [vmem:[%s3 + $0x28] sm:$0xff]
    %v842 = vld [vmem:[%s3 + $0x30] sm:$0xff]
    %v843 = vld [vmem:[%s3 + $0x38] sm:$0xff]
    %v844 = vld [vmem:[%s3 + $0x40] sm:$0xff]
    %v845 = vld [vmem:[%s3 + $0x48] sm:$0xff]
    %v846 = vld [vmem:[%s3 + $0x50] sm:$0xff]
    %v847 = vld [vmem:[%s3 + $0x58] sm:$0xff]
    %v848 = vld [vmem:[%s3 + $0x60] sm:$0xff]
    %v849 = vld [vmem:[%s3 + $0x68] sm:$0xff]
    %v850 = vld [vmem:[%s3 + $0x70] sm:$0xff]
    %v851 = vld [vmem:[%s3 + $0x78] sm:$0xff]
    %852 = vmatprep.subr.mxu0 0.0
    %853 = vmatpush1.msra.mxu0 %v836
    %854 = vmatprep.subr.mxu0 0.0
    %855 = vmatpush1.msra.mxu0 %v837
    %856 = vmatprep.subr.mxu0 0.0
    %857 = vmatpush1.msra.mxu0 %v838
    %858 = vmatprep.subr.mxu0 0.0
    %859 = vmatpush1.msra.mxu0 %v839
    %860 = vmatprep.subr.mxu0 0.0
    %861 = vmatpush1.msra.mxu0 %v840
    %862 = vmatprep.subr.mxu0 0.0
    %863 = vmatpush1.msra.mxu0 %v841
    %864 = vmatprep.subr.mxu0 0.0
    %865 = vmatpush1.msra.mxu0 %v842
    %866 = vmatprep.subr.mxu0 0.0
    %867 = vmatpush1.msra.mxu0 %v843
    %868 = vmatprep.subr.mxu0 0.0
    %869 = vmatpush1.msra.mxu0 %v844
    %870 = vmatprep.subr.mxu0 0.0
    %871 = vmatpush1.msra.mxu0 %v845
    %872 = vmatprep.subr.mxu0 0.0
    %873 = vmatpush1.msra.mxu0 %v846
    %874 = vmatprep.subr.mxu0 0.0
    %875 = vmatpush1.msra.mxu0 %v847
    %876 = vmatprep.subr.mxu0 0.0
    %877 = vmatpush1.msra.mxu0 %v848
    %878 = vmatprep.subr.mxu0 0.0
    %879 = vmatpush1.msra.mxu0 %v849
    %880 = vmatprep.subr.mxu0 0.0
    %881 = vmatpush1.msra.mxu0 %v850
    %882 = vmatprep.subr.mxu0 0.0
    %883 = vmatpush1.msra.mxu0 %v851
    %884 = vmatprep.subr.mxu0 0.0
    %885 = vmatpush1.msra.mxu0 0.0
    %886 = vmatprep.subr.mxu0 0.0
    %887 = vmatpush1.msra.mxu0 0.0
    %888 = vmatprep.subr.mxu0 0.0
    %889 = vmatpush1.msra.mxu0 0.0
    %890 = vmatprep.subr.mxu0 0.0
    %891 = vmatpush1.msra.mxu0 0.0
    %892 = vmatprep.subr.mxu0 0.0
    %893 = vmatpush1.msra.mxu0 0.0
    %894 = vmatprep.subr.mxu0 0.0
    %895 = vmatpush1.msra.mxu0 0.0
    %896 = vmatprep.subr.mxu0 0.0
    %897 = vmatpush1.msra.mxu0 0.0
    %898 = vmatprep.subr.mxu0 0.0
    %899 = vmatpush1.msra.mxu0 0.0
    %900 = vmatprep.subr.mxu0 0.0
    %901 = vmatpush1.msra.mxu0 0.0
    %902 = vmatprep.subr.mxu0 0.0
    %903 = vmatpush1.msra.mxu0 0.0
    %904 = vmatprep.subr.mxu0 0.0
    %905 = vmatpush1.msra.mxu0 0.0
    %906 = vmatprep.subr.mxu0 0.0
    %907 = vmatpush1.msra.mxu0 0.0
    %908 = vmatprep.subr.mxu0 0.0
    %909 = vmatpush1.msra.mxu0 0.0
    %910 = vmatprep.subr.mxu0 0.0
    %911 = vmatpush1.msra.mxu0 0.0
    %912 = vmatprep.subr.mxu0 0.0
    %913 = vmatpush1.msra.mxu0 0.0
    %914 = vmatprep.subr.mxu0 0.0
    %915 = vmatpush1.msra.mxu0 0.0
    %916 = vmatprep.mubr.f32.mxu0 0.0
    %917 = vmatmul.mubr.f32.gmra.mrb[0].mxu0 %v835
    %v918 = vpop.f32.mrb[0].mxu0
    %v919 = vadd.f32 0.0, %v918
    %v920 = vpop.f32.mrb[0].mxu0
    %921 = vdwg.mxu0
    %v922 = vld [vmem:[%s4] sm:$0x1]
    %v923 = vld [vmem:[%s5] sm:$0x1]
    %vm924 = vcmask 1041408
    %v925 = vsel %vm924, %v919, 0.0
    %v926 = vrot.slane %v925, 4
    %v927 = vadd.f32 %v925, %v926
    %v928 = vrot.slane %v927, 2
    %v929 = vadd.f32 %v927, %v928
    %v930 = vrot.slane %v929, 1
    %v931 = vadd.f32 %v929, %v930
    %v932 = vrcp.pop 2.0
    %v933 = vmul.f32 %v931, %v932
    %v934 = vsub.f32 %v919, %v933
    %v935 = vmul.f32 %v934, %v934
    %v936 = vsel %vm924, %v935, 0.0
    %v937 = vrot.slane %v936, 4
    %v938 = vadd.f32 %v936, %v937
    %v939 = vrot.slane %v938, 2
    %v940 = vadd.f32 %v938, %v939
    %v941 = vrot.slane %v940, 1
    %v942 = vadd.f32 %v940, %v941
    %v943 = vmul.f32 %v942, %v932
    %v945 = vlaneseq
    %v946 = vshrl.u32 %v945, 7
    %v947 = vsub.s32 0, %v946
    %v948 = vrot.slane %v922, %v947
    %v950 = vmul.f32 %v948, %v934
    %v951 = vadd.f32 %v943, 1e-05
    %v952 = vrsqrt.pop %v951
    %v953 = vmul.f32 %v950, %v952
    %v955 = vlaneseq
    %v956 = vshrl.u32 %v955, 7
    %v957 = vsub.s32 0, %v956
    %v958 = vrot.slane %v923, %v957
    %v960 = vadd.f32 %v953, %v958
    %v961 = vmax.f32 %v960, 0.0
    %v962 = vld [vmem:[%s6] sm:$0xff]
    %v963 = vld [vmem:[%s6 + $0x8] sm:$0xff]
    %v964 = vld [vmem:[%s6 + $0x10] sm:$0xff]
    %v965 = vld [vmem:[%s6 + $0x18] sm:$0xff]
    %v966 = vld [vmem:[%s6 + $0x20] sm:$0xff]
    %v967 = vld [vmem:[%s6 + $0x28] sm:$0xff]
    %v968 = vld [vmem:[%s6 + $0x30] sm:$0xff]
    %v969 = vld [vmem:[%s6 + $0x38] sm:$0xff]
    %v970 = vld [vmem:[%s6 + $0x40] sm:$0xff]
    %v971 = vld [vmem:[%s6 + $0x48] sm:$0xff]
    %v972 = vld [vmem:[%s6 + $0x50] sm:$0xff]
    %v973 = vld [vmem:[%s6 + $0x58] sm:$0xff]
    %v974 = vld [vmem:[%s6 + $0x60] sm:$0xff]
    %v975 = vld [vmem:[%s6 + $0x68] sm:$0xff]
    %v976 = vld [vmem:[%s6 + $0x70] sm:$0xff]
    %v977 = vld [vmem:[%s6 + $0x78] sm:$0xff]
    %978 = vmatprep.subr.mxu0 0.0
    %979 = vmatpush1.msra.mxu0 %v962
    %980 = vmatprep.subr.mxu0 0.0
    %981 = vmatpush1.msra.mxu0 %v963
    %982 = vmatprep.subr.mxu0 0.0
    %983 = vmatpush1.msra.mxu0 %v964
    %984 = vmatprep.subr.mxu0 0.0
    %985 = vmatpush1.msra.mxu0 %v965
    %986 = vmatprep.subr.mxu0 0.0
    %987 = vmatpush1.msra.mxu0 %v966
    %988 = vmatprep.subr.mxu0 0.0
    %989 = vmatpush1.msra.mxu0 %v967
    %990 = vmatprep.subr.mxu0 0.0
    %991 = vmatpush1.msra.mxu0 %v968
    %992 = vmatprep.subr.mxu0 0.0
    %993 = vmatpush1.msra.mxu0 %v969
    %994 = vmatprep.subr.mxu0 0.0
    %995 = vmatpush1.msra.mxu0 %v970
    %996 = vmatprep.subr.mxu0 0.0
    %997 = vmatpush1.msra.mxu0 %v971
    %998 = vmatprep.subr.mxu0 0.0
    %999 = vmatpush1.msra.mxu0 %v972
    %1000 = vmatprep.subr.mxu0 0.0
    %1001 = vmatpush1.msra.mxu0 %v973
    %1002 = vmatprep.subr.mxu0 0.0
    %1003 = vmatpush1.msra.mxu0 %v974
    %1004 = vmatprep.subr.mxu0 0.0
    %1005 = vmatpush1.msra.mxu0 %v975
    %1006 = vmatprep.subr.mxu0 0.0
    %1007 = vmatpush1.msra.mxu0 %v976
    %1008 = vmatprep.subr.mxu0 0.0
    %1009 = vmatpush1.msra.mxu0 %v977
    %1010 = vmatprep.subr.mxu0 0.0
    %1011 = vmatpush1.msra.mxu0 0.0
    %1012 = vmatprep.subr.mxu0 0.0
    %1013 = vmatpush1.msra.mxu0 0.0
    %1014 = vmatprep.subr.mxu0 0.0
    %1015 = vmatpush1.msra.mxu0 0.0
    %1016 = vmatprep.subr.mxu0 0.0
    %1017 = vmatpush1.msra.mxu0 0.0
    %1018 = vmatprep.subr.mxu0 0.0
    %1019 = vmatpush1.msra.mxu0 0.0
    %1020 = vmatprep.subr.mxu0 0.0
    %1021 = vmatpush1.msra.mxu0 0.0
    %1022 = vmatprep.subr.mxu0 0.0
    %1023 = vmatpush1.msra.mxu0 0.0
    %1024 = vmatprep.subr.mxu0 0.0
    %1025 = vmatpush1.msra.mxu0 0.0
    %1026 = vmatprep.subr.mxu0 0.0
    %1027 = vmatpush1.msra.mxu0 0.0
    %1028 = vmatprep.subr.mxu0 0.0
    %1029 = vmatpush1.msra.mxu0 0.0
    %1030 = vmatprep.subr.mxu0 0.0
    %1031 = vmatpush1.msra.mxu0 0.0
    %1032 = vmatprep.subr.mxu0 0.0
    %1033 = vmatpush1.msra.mxu0 0.0
    %1034 = vmatprep.subr.mxu0 0.0
    %1035 = vmatpush1.msra.mxu0 0.0
    %1036 = vmatprep.subr.mxu0 0.0
    %1037 = vmatpush1.msra.mxu0 0.0
    %1038 = vmatprep.subr.mxu0 0.0
    %1039 = vmatpush1.msra.mxu0 0.0
    %1040 = vmatprep.subr.mxu0 0.0
    %1041 = vmatpush1.msra.mxu0 0.0
    %1042 = vmatprep.mubr.f32.mxu0 0.0
    %1043 = vmatmul.mubr.f32.gmra.mrb[0].mxu0 %v961
    %v1044 = vpop.f32.mrb[0].mxu0
    %v1045 = vadd.f32 0.0, %v1044
    %v1046 = vpop.f32.mrb[0].mxu0
    %1047 = vdwg.mxu0
    %v1048 = vld [vmem:[%s7] sm:$0x1]
    %v1049 = vld [vmem:[%s8] sm:$0x1]
    %v1050 = vsel %vm924, %v1045, 0.0
    %v1051 = vrot.slane %v1050, 4
    %v1052 = vadd.f32 %v1050, %v1051
    %v1053 = vrot.slane %v1052, 2
    %v1054 = vadd.f32 %v1052, %v1053
    %v1055 = vrot.slane %v1054, 1
    %v1056 = vadd.f32 %v1054, %v1055
    %v1057 = vmul.f32 %v1056, %v932
    %v1058 = vsub.f32 %v1045, %v1057
    %v1059 = vmul.f32 %v1058, %v1058
    %v1060 = vsel %vm924, %v1059, 0.0
    %v1061 = vrot.slane %v1060, 4
    %v1062 = vadd.f32 %v1060, %v1061
    %v1063 = vrot.slane %v1062, 2
    %v1064 = vadd.f32 %v1062, %v1063
    %v1065 = vrot.slane %v1064, 1
    %v1066 = vadd.f32 %v1064, %v1065
    %v1067 = vmul.f32 %v1066, %v932
    %v1069 = vlaneseq
    %v1070 = vshrl.u32 %v1069, 7
    %v1071 = vsub.s32 0, %v1070
    %v1072 = vrot.slane %v1048, %v1071
    %v1074 = vmul.f32 %v1072, %v1058
    %v1075 = vadd.f32 %v1067, 1e-05
    %v1076 = vrsqrt.pop %v1075
    %v1077 = vmul.f32 %v1074, %v1076
    %v1079 = vlaneseq
    %v1080 = vshrl.u32 %v1079, 7
    %v1081 = vsub.s32 0, %v1080
    %v1082 = vrot.slane %v1049, %v1081
    %v1084 = vadd.f32 %v1077, %v1082
    %v1085 = vmax.f32 %v1084, 0.0
    %v1086 = vld [vmem:[%s9] sm:$0xff]
    %v1087 = vld [vmem:[%s9 + $0x8] sm:$0xff]
    %v1088 = vld [vmem:[%s9 + $0x10] sm:$0xff]
    %v1089 = vld [vmem:[%s9 + $0x18] sm:$0xff]
    %v1090 = vld [vmem:[%s9 + $0x20] sm:$0xff]
    %v1091 = vld [vmem:[%s9 + $0x28] sm:$0xff]
    %v1092 = vld [vmem:[%s9 + $0x30] sm:$0xff]
    %v1093 = vld [vmem:[%s9 + $0x38] sm:$0xff]
    %v1094 = vld [vmem:[%s9 + $0x40] sm:$0xff]
    %v1095 = vld [vmem:[%s9 + $0x48] sm:$0xff]
    %v1096 = vld [vmem:[%s9 + $0x50] sm:$0xff]
    %v1097 = vld [vmem:[%s9 + $0x58] sm:$0xff]
    %v1098 = vld [vmem:[%s9 + $0x60] sm:$0xff]
    %v1099 = vld [vmem:[%s9 + $0x68] sm:$0xff]
    %v1100 = vld [vmem:[%s9 + $0x70] sm:$0xff]
    %v1101 = vld [vmem:[%s9 + $0x78] sm:$0xff]
    %v1102 = vld [vmem:[%s10] sm:$0x1]
    %v1104 = vlaneseq
    %v1105 = vshrl.u32 %v1104, 7
    %v1106 = vsub.s32 0, %v1105
    %v1107 = vrot.slane %v1102, %v1106
    %1109 = vmatprep.subr.mxu0 0.0
    %1110 = vmatpush1.msra.mxu0 %v1086
    %1111 = vmatprep.subr.mxu0 0.0
    %1112 = vmatpush1.msra.mxu0 %v1087
    %1113 = vmatprep.subr.mxu0 0.0
    %1114 = vmatpush1.msra.mxu0 %v1088
    %1115 = vmatprep.subr.mxu0 0.0
    %1116 = vmatpush1.msra.mxu0 %v1089
    %1117 = vmatprep.subr.mxu0 0.0
    %1118 = vmatpush1.msra.mxu0 %v1090
    %1119 = vmatprep.subr.mxu0 0.0
    %1120 = vmatpush1.msra.mxu0 %v1091
    %1121 = vmatprep.subr.mxu0 0.0
    %1122 = vmatpush1.msra.mxu0 %v1092
    %1123 = vmatprep.subr.mxu0 0.0
    %1124 = vmatpush1.msra.mxu0 %v1093
    %1125 = vmatprep.subr.mxu0 0.0
    %1126 = vmatpush1.msra.mxu0 %v1094
    %1127 = vmatprep.subr.mxu0 0.0
    %1128 = vmatpush1.msra.mxu0 %v1095
    %1129 = vmatprep.subr.mxu0 0.0
    %1130 = vmatpush1.msra.mxu0 %v1096
    %1131 = vmatprep.subr.mxu0 0.0
    %1132 = vmatpush1.msra.mxu0 %v1097
    %1133 = vmatprep.subr.mxu0 0.0
    %1134 = vmatpush1.msra.mxu0 %v1098
    %1135 = vmatprep.subr.mxu0 0.0
    %1136 = vmatpush1.msra.mxu0 %v1099
    %1137 = vmatprep.subr.mxu0 0.0
    %1138 = vmatpush1.msra.mxu0 %v1100
    %1139 = vmatprep.subr.mxu0 0.0
    %1140 = vmatpush1.msra.mxu0 %v1101
    %1141 = vmatprep.subr.mxu0 0.0
    %1142 = vmatpush1.msra.mxu0 0.0
    %1143 = vmatprep.subr.mxu0 0.0
    %1144 = vmatpush1.msra.mxu0 0.0
    %1145 = vmatprep.subr.mxu0 0.0
    %1146 = vmatpush1.msra.mxu0 0.0
    %1147 = vmatprep.subr.mxu0 0.0
    %1148 = vmatpush1.msra.mxu0 0.0
    %1149 = vmatprep.subr.mxu0 0.0
    %1150 = vmatpush1.msra.mxu0 0.0
    %1151 = vmatprep.subr.mxu0 0.0
    %1152 = vmatpush1.msra.mxu0 0.0
    %1153 = vmatprep.subr.mxu0 0.0
    %1154 = vmatpush1.msra.mxu0 0.0
    %1155 = vmatprep.subr.mxu0 0.0
    %1156 = vmatpush1.msra.mxu0 0.0
    %1157 = vmatprep.subr.mxu0 0.0
    %1158 = vmatpush1.msra.mxu0 0.0
    %1159 = vmatprep.subr.mxu0 0.0
    %1160 = vmatpush1.msra.mxu0 0.0
    %1161 = vmatprep.subr.mxu0 0.0
    %1162 = vmatpush1.msra.mxu0 0.0
    %1163 = vmatprep.subr.mxu0 0.0
    %1164 = vmatpush1.msra.mxu0 0.0
    %1165 = vmatprep.subr.mxu0 0.0
    %1166 = vmatpush1.msra.mxu0 0.0
    %1167 = vmatprep.subr.mxu0 0.0
    %1168 = vmatpush1.msra.mxu0 0.0
    %1169 = vmatprep.subr.mxu0 0.0
    %1170 = vmatpush1.msra.mxu0 0.0
    %1171 = vmatprep.subr.mxu0 0.0
    %1172 = vmatpush1.msra.mxu0 0.0
    %1173 = vmatprep.mubr.f32.mxu0 0.0
    %1174 = vmatmul.mubr.f32.gmra.mrb[0].mxu0 %v1085
    %v1175 = vpop.f32.mrb[0].mxu0
    %v1176 = vadd.f32 %v1107, %v1175
    %v1177 = vpop.f32.mrb[0].mxu0
    %1178 = vdwg.mxu0
    %1179 = vst [vmem:[#allocation2] sm:$0x3] %v1176
    // Predicated region
    $region46: #{vicreg_forward.1} parent=1 // pred_check
      _
    $region47: #{vicreg_forward.1} parent=1 // pred_check_branch
      %1181 = sbr.rel (0) target = $region49
    $region48: #{vicreg_forward.1} parent=1 // pred_region
      %s1183 = ssub.s32 32, 32
      %1184 = vsyncadd [#allocation3], %s1183
      %s1186 = sshll.u32 [#allocation2], 4
      %s1187 = int_to_ptr.vmem [resolvable:$true] %s1186
      %1189 = dma.vmem_to_hbm [thread:$0]  %s1187, 32, %s11, [#allocation3]
    $region49: #{vicreg_forward.1} parent=1 // pred_fallthru
      _
    // Predicated region
    $region50: #{vicreg_forward.1} parent=1 // pred_check
      _
    $region51: #{vicreg_forward.1} parent=1 // pred_check_branch
      %1191 = sbr.rel (0) target = $region53
    $region52: #{vicreg_forward.1} parent=1 // pred_region
      %1192 = dma.done [#allocation3], 32
    $region53: #{vicreg_forward.1} parent=1 // pred_fallthru
      _
    %1193 = vsyncpa [#allocation3], 1

</llo_original>
